<compile_context>
chip_gen: v7x
topology: tpu7x:2x2x1
jax: 0.10.0
libtpu: 0.0.40
codegen_flags: <defaults>
</compile_context>

<pallas_src>
from functools import partial

import jax
import jax.numpy as jnp
import numpy as np
from jax.experimental import pallas as pl
from jax.experimental.pallas import tpu as pltpu


def tcn_block_kernel(x_ref, w1d_ref, w2_ref, bn_ref, out_ref, h_scr,
                     *, K, dilation, padding, Cout_p):
    """One grid step = Bb batch elements, full (front-padded) time axis.

    x_ref  : (Bb, T+padding, Cin_p)  activations, channels-last, compute dtype,
                                     time already front-padded with zeros
    w1d_ref: (K*Cin_p, 2*Cout_p)     conv1 weight (im2col, tap-major) with the
                                     1x1 downsample fused as the last Cout_p
                                     output columns (rows = last tap == x[t])
    w2_ref : (K*Cout_p, Cout_p)      conv2 weight (im2col, tap-major)
    bn_ref : (6, T, Cout_p) f32      rows = [s1, t1, s2, t2, s3, t3]; conv and
                                     downsample biases pre-folded into t*
    out_ref: (Bb, T, Cout_p)
    h_scr  : (Bb, T+padding, Cout_p) compute-dtype staging buffer for conv2
    """
    Bb, T_pad, _ = x_ref.shape
    T = T_pad - padding

    def causal_im2col(ref):
        # Tap j of the causal dilated conv is the static window
        # rows [j*dilation, j*dilation + T) of the front-padded buffer; fuse
        # the K taps on the (128-aligned) lane axis -> one MXU matmul per conv.
        C = ref.shape[-1]
        taps = [ref[:, j * dilation:j * dilation + T, :] for j in range(K)]
        return jnp.concatenate(taps, axis=-1).reshape(Bb * T, K * C)

    def bn_relu(y, row):
        # eval-mode BatchNorm1d(time_len): pre-broadcast (T, Cout_p) scale /
        # shift (conv bias folded in) -> pure f32 VPU FMA, then ReLU.
        y = y.reshape(Bb, T, Cout_p)
        return jnp.maximum(y * bn_ref[row][None] + bn_ref[row + 1][None], 0.0)

    # conv1 and the 1x1 downsample in ONE (Bb*T, K*Cin_p) x (K*Cin_p, 2*Cout_p)
    # MXU matmul (fills the 256-wide MXU on v6e/v7x; ends x's live range here).
    r = jnp.dot(causal_im2col(x_ref), w1d_ref[...],
                preferred_element_type=jnp.float32)              # (Bb*T, 2*Cout_p)
    ident = r[:, Cout_p:].reshape(Bb, T, Cout_p)                 # downsample(x)
    h = bn_relu(r[:, :Cout_p], 0)                                # conv1->bn1->relu

    # Stage h (compute dtype) into a front-zero-padded scratch for conv2's
    # im2col.  Zeroing only the `padding` rows is cheap, so do it every step
    # (a pl.when(program_id == 0) guard would never fire on the second
    # TensorCore under megacore partitioning of the "parallel" batch axis).
    h_scr[:, :padding, :] = jnp.zeros((Bb, padding, Cout_p), h_scr.dtype)
    h_scr[:, padding:, :] = h.astype(h_scr.dtype)

    h2 = jnp.dot(causal_im2col(h_scr), w2_ref[...],
                 preferred_element_type=jnp.float32)             # (Bb*T, Cout_p)
    h2 = bn_relu(h2, 2)                                          # conv2->bn2->relu

    # residual add -> bn3 -> relu (dropout is eval-mode identity)
    out_ref[...] = bn_relu(ident + h2, 4).astype(out_ref.dtype)


def _round_up(n, m):
    return ((n + m - 1) // m) * m


def temporal_conv_block(x, p, *, kernel_size, dilation, padding,
                        batch_block=None, compute_dtype=jnp.bfloat16,
                        out_dtype=None, vmem_budget_bytes=None):
    assert padding == (kernel_size - 1) * dilation and padding > 0, \
        "causal TCN config (stride=1, padding=(K-1)*dilation)"
    B, T, Cin = x.shape
    K = kernel_size
    Cout = p["w1"].shape[-1]
    cdt = jnp.dtype(compute_dtype)
    out_dt = jnp.dtype(out_dtype) if out_dtype is not None else x.dtype

    LANE = 128
    Cin_p, Cout_p = _round_up(Cin, LANE), _round_up(Cout, LANE)
    Tp = T + padding

    # ---- wrapper-side layout prep (cheap XLA ops, outside the kernel) ------
    # x: lane-pad channels to 128, front-pad time once, narrow DMA to the
    # compute dtype (bf16 halves HBM traffic; matmul inputs are bf16 anyway).
    x_in = jnp.pad(x, ((0, 0), (padding, 0), (0, Cin_p - Cin))).astype(cdt)

    # conv weights, im2col-flattened tap-major (row index = j*C + c), channel
    # padded.  The 1x1 downsample is fused as extra output columns of conv1:
    # its rows sit at the last tap (which IS x[t]) of the im2col contraction.
    w1 = jnp.pad(p["w1"], ((0, 0), (0, Cin_p - Cin), (0, Cout_p - Cout)))
    w2 = jnp.pad(p["w2"], ((0, 0), (0, Cout_p - Cout), (0, Cout_p - Cout)))
    wd = jnp.pad(p["wd"], ((0, Cin_p - Cin), (0, Cout_p - Cout)))
    wd_cols = jnp.zeros((K * Cin_p, Cout_p), wd.dtype).at[(K - 1) * Cin_p:].set(wd)
    w1d = jnp.concatenate([w1.reshape(K * Cin_p, Cout_p), wd_cols],
                          axis=1).astype(cdt)                    # (K*Cin_p, 2*Cout_p)
    w2 = w2.reshape(K * Cout_p, Cout_p).astype(cdt)

    # BN (eval mode) folded to per-(time, channel) scale/shift, pre-broadcast
    # so bn() in the kernel is a pure VPU FMA; conv / downsample biases folded
    # into the shifts:  (y + b) * s + t  ==  y * s + (b * s + t).
    def bn_rows(scale_t1, shift_t1, bias_1c):
        s = jnp.broadcast_to(scale_t1, (T, Cout))
        b = jnp.broadcast_to(shift_t1 + bias_1c * scale_t1, (T, Cout))
        pad = ((0, 0), (0, Cout_p - Cout))
        return jnp.pad(s, pad), jnp.pad(b, pad)

    bn_tab = jnp.stack(
        bn_rows(p["bn1_s"], p["bn1_b"], p["b1"])
        + bn_rows(p["bn2_s"], p["bn2_b"], p["b2"])
        + bn_rows(p["bn3_s"], p["bn3_b"], p["bd"]),
        axis=0).astype(jnp.float32)                              # (6, T, Cout_p)

    # ---- VMEM-aware block sizing -------------------------------------------
    if vmem_budget_bytes is None:
        try:
            cap = pltpu.get_tpu_info().vmem_capacity_bytes
        except Exception:
            cap = 64 * 1024 * 1024
        # ~24 MiB on 128-MiB parts (v5e/v6e), ~16 MiB on v7x's 64-MiB VMEM.
        vmem_budget_bytes = min(24 * 1024 * 1024, cap // 4)

    w_bytes = (w1d.size + w2.size) * cdt.itemsize + bn_tab.size * 4

    def step_bytes(Bb):
        # 2x for double-buffered pipeline blocks; constants conservatively
        # counted double-buffered too.  TODO(synk): single-buffer the constant
        # operands (pipeline_mode=pl.Buffered(1)) to reclaim ~w_bytes of VMEM.
        io = 2 * Bb * (Tp * Cin_p * cdt.itemsize + T * Cout_p * out_dt.itemsize)
        scratch = Bb * Tp * Cout_p * cdt.itemsize
        inter = Bb * T * (K * Cin_p * cdt.itemsize         # conv1 im2col
                          + K * Cout_p * cdt.itemsize      # conv2 im2col
                          + 6 * Cout_p * 4)                # f32 matmul results / temps
        return io + 2 * w_bytes + scratch + inter

    if batch_block is None:
        # Largest Bb under the VMEM budget while keeping >= 4 grid steps when
        # possible (>= 2 steps per TensorCore on dual-TC chips).
        min_steps = 4 if B >= 4 else min(B, 2)
        batch_block = 1
        for d in sorted((d for d in range(1, B + 1) if B % d == 0), reverse=True):
            if B // d >= min_steps and step_bytes(d) <= vmem_budget_bytes:
                batch_block = d
                break
    assert B % batch_block == 0
    Bb = batch_block

    vmem_limit = min(48 * 1024 * 1024,
                     max(16 * 1024 * 1024, int(1.5 * step_bytes(Bb)) + (1 << 20)))

    flops = (2 * B * T * K * Cin_p * 2 * Cout_p        # fused conv1 + downsample
             + 2 * B * T * K * Cout_p * Cout_p         # conv2
             + 12 * B * T * Cout_p)                    # BN / ReLU / residual
    bytes_accessed = int(x_in.size * cdt.itemsize
                         + B * T * Cout_p * out_dt.itemsize + w_bytes)

    def const_spec(shape):
        n = len(shape)
        return pl.BlockSpec(shape, lambda b, n=n: (0,) * n)

    kernel = partial(tcn_block_kernel, K=K, dilation=dilation,
                     padding=padding, Cout_p=Cout_p)

    # TODO(synk): for very long T, add a time-tile grid axis with a `padding`
    # halo (conv2 needs `padding` rows of conv1 history) so Bb=1 blocks still
    # fit v7x's 64 MiB VMEM; full-T blocks are fine at this module's sizes.
    out = pl.pallas_call(
        kernel,
        out_shape=jax.ShapeDtypeStruct((B, T, Cout_p), out_dt),
        grid=(B // Bb,),
        in_specs=[
            pl.BlockSpec((Bb, Tp, Cin_p), lambda b: (b, 0, 0)),   # x (time-padded)
            const_spec((K * Cin_p, 2 * Cout_p)),                  # conv1 + fused downsample
            const_spec((K * Cout_p, Cout_p)),                     # conv2
            const_spec((6, T, Cout_p)),                           # BN scale/shift (+ biases)
        ],
        out_specs=pl.BlockSpec((Bb, T, Cout_p), lambda b: (b, 0, 0)),
        scratch_shapes=[pltpu.VMEM((Bb, Tp, Cout_p), cdt)],
        compiler_params=pltpu.CompilerParams(
            dimension_semantics=("parallel",),
            vmem_limit_bytes=vmem_limit),
        cost_estimate=pl.CostEstimate(flops=flops, transcendentals=0,
                                      bytes_accessed=bytes_accessed),
    )(x_in, w1d, w2, bn_tab)
    return out[..., :Cout]


def make_params(key, Cin, Cout, K, T, eps=1e-5):
    keys = jax.random.split(key, 18)

    def uinit(k, shape, fan_in):
        bound = 1.0 / np.sqrt(fan_in)
        return jax.random.uniform(k, shape, jnp.float32, -bound, bound)

    def weight_norm(v):
        # nn.utils.weight_norm: w = g * v / ||v|| with g initialized to ||v||,
        # so the effective forward weight at init equals v.
        norm = jnp.sqrt(jnp.sum(v * v, axis=(1, 2), keepdims=True))
        return norm * v / norm

    w1_oik = weight_norm(uinit(keys[0], (Cout, Cin, K), Cin * K))   # (O, I, K)
    b1 = uinit(keys[1], (1, Cout), Cin * K)
    w2_oik = weight_norm(uinit(keys[2], (Cout, Cout, K), Cout * K))
    b2 = uinit(keys[3], (1, Cout), Cout * K)
    wd_oik = uinit(keys[4], (Cout, Cin, 1), Cin)                    # 1x1 downsample
    bd = uinit(keys[5], (1, Cout), Cin)

    def bn_fold(k4):
        # Randomized running stats / affine so the per-time BN fold is actually
        # exercised by the self-test (eval mode).
        kg, kb, km, kv = k4
        gamma = jax.random.uniform(kg, (T,), jnp.float32, 0.5, 1.5)
        beta = 0.1 * jax.random.normal(kb, (T,), jnp.float32)
        mean = 0.5 * jax.random.normal(km, (T,), jnp.float32)
        var = jax.random.uniform(kv, (T,), jnp.float32, 0.5, 1.5)
        s = gamma / jnp.sqrt(var + eps)
        return s.reshape(T, 1), (beta - mean * s).reshape(T, 1)

    bn1_s, bn1_b = bn_fold(keys[6:10])
    bn2_s, bn2_b = bn_fold(keys[10:14])
    bn3_s, bn3_b = bn_fold(keys[14:18])

    return dict(
        # kernel-layout weights: (K, Cin, Cout) so tap j / in-channel c maps to
        # row j*Cin + c of the im2col-flattened matrix.
        w1=jnp.transpose(w1_oik, (2, 1, 0)), b1=b1,
        w2=jnp.transpose(w2_oik, (2, 1, 0)), b2=b2,
        wd=jnp.transpose(wd_oik[:, :, 0], (1, 0)), bd=bd,
        bn1_s=bn1_s, bn1_b=bn1_b,
        bn2_s=bn2_s, bn2_b=bn2_b,
        bn3_s=bn3_s, bn3_b=bn3_b,
        # PyTorch-layout copies for the pure-JAX reference check
        w1_oik=w1_oik, w2_oik=w2_oik, wd_oik=wd_oik,
    )


def ref_forward(x, p, *, padding, dilation):
    """Pure-JAX reference mirroring the PyTorch forward (eval mode)."""
    def conv1d(xi, w_oik, b_1o, pad, dil):
        y = jax.lax.conv_general_dilated(
            jnp.transpose(xi, (0, 2, 1)), w_oik, window_strides=(1,),
            padding=[(pad, pad)], rhs_dilation=(dil,),
            dimension_numbers=("NCH", "OIH", "NCH"))
        return jnp.transpose(y, (0, 2, 1)) + b_1o

    out = conv1d(x, p["w1_oik"], p["b1"], padding, dilation)[:, :-padding]
    out = jax.nn.relu(out * p["bn1_s"] + p["bn1_b"])
    out = conv1d(out, p["w2_oik"], p["b2"], padding, dilation)[:, :-padding]
    out = jax.nn.relu(out * p["bn2_s"] + p["bn2_b"])
    identity = conv1d(x, p["wd_oik"], p["bd"], 0, 1)
    out = jax.nn.relu((identity + out) * p["bn3_s"] + p["bn3_b"])
    return out


if __name__ == "__main__":
    B, T, Cin, Cout, K, dil = 2, 8, 4, 8, 3, 1
    padding = (K - 1) * dil          # causal padding -> output time len == T

    key = jax.random.PRNGKey(0)
    kx, kp = jax.random.split(key)
    x = jax.random.normal(kx, (B, T, Cin), jnp.float32)
    params = make_params(kp, Cin, Cout, K, T)

    ref = np.asarray(ref_forward(x, params, padding=padding, dilation=dil))

    # Strict semantics / layout check with f32 matmul inputs.
    out_f32 = jax.block_until_ready(
        temporal_conv_block(x, params, kernel_size=K, dilation=dil,
                            padding=padding, compute_dtype=jnp.float32))
    np.testing.assert_allclose(np.asarray(out_f32), ref, rtol=1e-5, atol=1e-5)

    # Default fast path: bf16 matmul inputs / DMA, f32 accumulate + VPU math.
    # Tolerance scaled by the bf16 ulp, the K*(Cin+Cout) contraction length and
    # the output magnitude (layout bugs give O(1) errors, caught above anyway).
    out = jax.block_until_ready(
        temporal_conv_block(x, params, kernel_size=K, dilation=dil,
                            padding=padding))
    bf16_atol = float(2.0 ** -7 * np.sqrt(K * (Cin + Cout))
                      * max(1.0, np.abs(ref).max()))
    np.testing.assert_allclose(np.asarray(out), ref, rtol=0.0, atol=bf16_atol)
    print("KERNEL_OK")
</pallas_src>

<mosaic_0001>
module attributes {stable_mosaic.version = 11 : i64} {
  func.func @tcn_block_kernel(%arg0: i32, %arg1: memref<1x10x128xf32, #tpu.memory_space<vmem>>, %arg2: memref<384x256xf32, #tpu.memory_space<vmem>>, %arg3: memref<384x128xf32, #tpu.memory_space<vmem>>, %arg4: memref<6x8x128xf32, #tpu.memory_space<vmem>>, %arg5: memref<1x8x128xf32, #tpu.memory_space<vmem>>, %arg6: memref<1x10x128xf32, #tpu.memory_space<vmem>>) attributes {dimension_semantics = [#tpu.dimension_semantics<parallel>], iteration_bounds = array<i64: 2>, scalar_prefetch = 0 : i64, scratch_operands = 1 : i64, tpu.core_type = #tpu.core_type<tc>, window_params = [{transform_indices = @transform_0, window_bounds = array<i64: 1, 10, 128>}, {pipeline_mode = #tpu.pipeline_mode<synchronous>, transform_indices = @transform_1, window_bounds = array<i64: 384, 256>}, {pipeline_mode = #tpu.pipeline_mode<synchronous>, transform_indices = @transform_2, window_bounds = array<i64: 384, 128>}, {pipeline_mode = #tpu.pipeline_mode<synchronous>, transform_indices = @transform_3, window_bounds = array<i64: 6, 8, 128>}, {transform_indices = @transform_4, window_bounds = array<i64: 1, 8, 128>}]} {
    %c0 = arith.constant 0 : index
    %c0_0 = arith.constant 0 : index
    %c0_1 = arith.constant 0 : index
    %0 = vector.load %arg1[%c0, %c0_0, %c0_1] : memref<1x10x128xf32, #tpu.memory_space<vmem>>, vector<1x8x128xf32>
    %c0_2 = arith.constant 0 : index
    %c1 = arith.constant 1 : index
    %c0_3 = arith.constant 0 : index
    %1 = vector.load %arg1[%c0_2, %c1, %c0_3] : memref<1x10x128xf32, #tpu.memory_space<vmem>>, vector<1x8x128xf32>
    %c0_4 = arith.constant 0 : index
    %c2 = arith.constant 2 : index
    %c0_5 = arith.constant 0 : index
    %2 = vector.load %arg1[%c0_4, %c2, %c0_5] : memref<1x10x128xf32, #tpu.memory_space<vmem>>, vector<1x8x128xf32>
    %3 = tpu.concatenate %0, %1, %2 in 2 : vector<1x8x128xf32>, vector<1x8x128xf32>, vector<1x8x128xf32> -> vector<1x8x384xf32>
    %4 = vector.shape_cast %3 : vector<1x8x384xf32> to vector<8x384xf32>
    %c0_6 = arith.constant 0 : index
    %c0_7 = arith.constant 0 : index
    %5 = vector.load %arg2[%c0_6, %c0_7] : memref<384x256xf32, #tpu.memory_space<vmem>>, vector<384x256xf32>
    %cst = arith.constant dense<0.000000e+00> : vector<8x256xf32>
    %6 = tpu.matmul %4, %5, %cst {dimension_numbers = #tpu.dot_dimension_numbers<[1], [0], [0], [1], [0, 0, 1, 1], [], []>} : vector<8x384xf32>, vector<384x256xf32>, vector<8x256xf32> -> vector<8x256xf32>
    %7 = vector.extract_strided_slice %6 {offsets = [0, 128], sizes = [8, 128], strides = [1, 1]} : vector<8x256xf32> to vector<8x128xf32>
    %8 = vector.shape_cast %7 : vector<8x128xf32> to vector<1x8x128xf32>
    %9 = vector.extract_strided_slice %6 {offsets = [0, 0], sizes = [8, 128], strides = [1, 1]} : vector<8x256xf32> to vector<8x128xf32>
    %10 = vector.shape_cast %9 : vector<8x128xf32> to vector<1x8x128xf32>
    %c0_8 = arith.constant 0 : index
    %c0_9 = arith.constant 0 : index
    %c0_10 = arith.constant 0 : index
    %11 = vector.load %arg4[%c0_8, %c0_9, %c0_10] : memref<6x8x128xf32, #tpu.memory_space<vmem>>, vector<1x8x128xf32>
    %12 = vector.shape_cast %11 : vector<1x8x128xf32> to vector<8x128xf32>
    %13 = vector.shape_cast %12 : vector<8x128xf32> to vector<1x8x128xf32>
    %14 = arith.mulf %10, %13 : vector<1x8x128xf32>
    %c1_11 = arith.constant 1 : index
    %c0_12 = arith.constant 0 : index
    %c0_13 = arith.constant 0 : index
    %15 = vector.load %arg4[%c1_11, %c0_12, %c0_13] : memref<6x8x128xf32, #tpu.memory_space<vmem>>, vector<1x8x128xf32>
    %16 = vector.shape_cast %15 : vector<1x8x128xf32> to vector<8x128xf32>
    %17 = vector.shape_cast %16 : vector<8x128xf32> to vector<1x8x128xf32>
    %18 = arith.addf %14, %17 : vector<1x8x128xf32>
    %cst_14 = arith.constant 0.000000e+00 : f32
    %19 = vector.broadcast %cst_14 : f32 to vector<1x8x128xf32>
    %20 = arith.maximumf %18, %19 : vector<1x8x128xf32>
    %cst_15 = arith.constant 0.000000e+00 : f32
    %21 = vector.broadcast %cst_15 : f32 to vector<1x2x128xf32>
    %c0_16 = arith.constant 0 : index
    %c0_17 = arith.constant 0 : index
    %c0_18 = arith.constant 0 : index
    %22 = vector.load %arg6[%c0_16, %c0_17, %c0_18] : memref<1x10x128xf32, #tpu.memory_space<vmem>>, vector<1x2x128xf32>
    tpu.vector_store %arg6[%c0_16, %c0_17, %c0_18], %21 {strides = array<i32>} : memref<1x10x128xf32, #tpu.memory_space<vmem>>, vector<1x2x128xf32>,
    %c0_19 = arith.constant 0 : index
    %c2_20 = arith.constant 2 : index
    %c0_21 = arith.constant 0 : index
    %23 = vector.load %arg6[%c0_19, %c2_20, %c0_21] : memref<1x10x128xf32, #tpu.memory_space<vmem>>, vector<1x8x128xf32>
    tpu.vector_store %arg6[%c0_19, %c2_20, %c0_21], %20 {strides = array<i32>} : memref<1x10x128xf32, #tpu.memory_space<vmem>>, vector<1x8x128xf32>,
    %c0_22 = arith.constant 0 : index
    %c0_23 = arith.constant 0 : index
    %c0_24 = arith.constant 0 : index
    %24 = vector.load %arg6[%c0_22, %c0_23, %c0_24] : memref<1x10x128xf32, #tpu.memory_space<vmem>>, vector<1x8x128xf32>
    %c0_25 = arith.constant 0 : index
    %c1_26 = arith.constant 1 : index
    %c0_27 = arith.constant 0 : index
    %25 = vector.load %arg6[%c0_25, %c1_26, %c0_27] : memref<1x10x128xf32, #tpu.memory_space<vmem>>, vector<1x8x128xf32>
    %c0_28 = arith.constant 0 : index
    %c2_29 = arith.constant 2 : index
    %c0_30 = arith.constant 0 : index
    %26 = vector.load %arg6[%c0_28, %c2_29, %c0_30] : memref<1x10x128xf32, #tpu.memory_space<vmem>>, vector<1x8x128xf32>
    %27 = tpu.concatenate %24, %25, %26 in 2 : vector<1x8x128xf32>, vector<1x8x128xf32>, vector<1x8x128xf32> -> vector<1x8x384xf32>
    %28 = vector.shape_cast %27 : vector<1x8x384xf32> to vector<8x384xf32>
    %c0_31 = arith.constant 0 : index
    %c0_32 = arith.constant 0 : index
    %29 = vector.load %arg3[%c0_31, %c0_32] : memref<384x128xf32, #tpu.memory_space<vmem>>, vector<384x128xf32>
    %cst_33 = arith.constant dense<0.000000e+00> : vector<8x128xf32>
    %30 = tpu.matmul %28, %29, %cst_33 {dimension_numbers = #tpu.dot_dimension_numbers<[1], [0], [0], [1], [0, 0, 1, 1], [], []>} : vector<8x384xf32>, vector<384x128xf32>, vector<8x128xf32> -> vector<8x128xf32>
    %31 = vector.shape_cast %30 : vector<8x128xf32> to vector<1x8x128xf32>
    %c2_34 = arith.constant 2 : index
    %c0_35 = arith.constant 0 : index
    %c0_36 = arith.constant 0 : index
    %32 = vector.load %arg4[%c2_34, %c0_35, %c0_36] : memref<6x8x128xf32, #tpu.memory_space<vmem>>, vector<1x8x128xf32>
    %33 = vector.shape_cast %32 : vector<1x8x128xf32> to vector<8x128xf32>
    %34 = vector.shape_cast %33 : vector<8x128xf32> to vector<1x8x128xf32>
    %35 = arith.mulf %31, %34 : vector<1x8x128xf32>
    %c3 = arith.constant 3 : index
    %c0_37 = arith.constant 0 : index
    %c0_38 = arith.constant 0 : index
    %36 = vector.load %arg4[%c3, %c0_37, %c0_38] : memref<6x8x128xf32, #tpu.memory_space<vmem>>, vector<1x8x128xf32>
    %37 = vector.shape_cast %36 : vector<1x8x128xf32> to vector<8x128xf32>
    %38 = vector.shape_cast %37 : vector<8x128xf32> to vector<1x8x128xf32>
    %39 = arith.addf %35, %38 : vector<1x8x128xf32>
    %cst_39 = arith.constant 0.000000e+00 : f32
    %40 = vector.broadcast %cst_39 : f32 to vector<1x8x128xf32>
    %41 = arith.maximumf %39, %40 : vector<1x8x128xf32>
    %42 = arith.addf %8, %41 : vector<1x8x128xf32>
    %c4 = arith.constant 4 : index
    %c0_40 = arith.constant 0 : index
    %c0_41 = arith.constant 0 : index
    %43 = vector.load %arg4[%c4, %c0_40, %c0_41] : memref<6x8x128xf32, #tpu.memory_space<vmem>>, vector<1x8x128xf32>
    %44 = vector.shape_cast %43 : vector<1x8x128xf32> to vector<8x128xf32>
    %45 = vector.shape_cast %44 : vector<8x128xf32> to vector<1x8x128xf32>
    %46 = arith.mulf %42, %45 : vector<1x8x128xf32>
    %c5 = arith.constant 5 : index
    %c0_42 = arith.constant 0 : index
    %c0_43 = arith.constant 0 : index
    %47 = vector.load %arg4[%c5, %c0_42, %c0_43] : memref<6x8x128xf32, #tpu.memory_space<vmem>>, vector<1x8x128xf32>
    %48 = vector.shape_cast %47 : vector<1x8x128xf32> to vector<8x128xf32>
    %49 = vector.shape_cast %48 : vector<8x128xf32> to vector<1x8x128xf32>
    %50 = arith.addf %46, %49 : vector<1x8x128xf32>
    %cst_44 = arith.constant 0.000000e+00 : f32
    %51 = vector.broadcast %cst_44 : f32 to vector<1x8x128xf32>
    %52 = arith.maximumf %50, %51 : vector<1x8x128xf32>
    %c0_45 = arith.constant 0 : index
    %c0_46 = arith.constant 0 : index
    %c0_47 = arith.constant 0 : index
    %53 = vector.load %arg5[%c0_45, %c0_46, %c0_47] : memref<1x8x128xf32, #tpu.memory_space<vmem>>, vector<1x8x128xf32>
    tpu.vector_store %arg5[%c0_45, %c0_46, %c0_47], %52 {strides = array<i32>} : memref<1x8x128xf32, #tpu.memory_space<vmem>>, vector<1x8x128xf32>,
    return
  }
  func.func @transform_0(%arg0: i32) -> (i32, i32, i32) {
    %c0_i32 = arith.constant 0 : i32
    %c0_i32_0 = arith.constant 0 : i32
    %c0_i32_1 = arith.constant 0 : i32
    return %arg0, %c0_i32, %c0_i32_0 : i32, i32, i32
  }
  func.func @transform_1(%arg0: i32) -> (i32, i32) {
    %c0_i32 = arith.constant 0 : i32
    %c0_i32_0 = arith.constant 0 : i32
    %c0_i32_1 = arith.constant 0 : i32
    return %c0_i32, %c0_i32_0 : i32, i32
  }
  func.func @transform_2(%arg0: i32) -> (i32, i32) {
    %c0_i32 = arith.constant 0 : i32
    %c0_i32_0 = arith.constant 0 : i32
    %c0_i32_1 = arith.constant 0 : i32
    return %c0_i32, %c0_i32_0 : i32, i32
  }
  func.func @transform_3(%arg0: i32) -> (i32, i32, i32) {
    %c0_i32 = arith.constant 0 : i32
    %c0_i32_0 = arith.constant 0 : i32
    %c0_i32_1 = arith.constant 0 : i32
    %c0_i32_2 = arith.constant 0 : i32
    return %c0_i32, %c0_i32_0, %c0_i32_1 : i32, i32, i32
  }
  func.func @transform_4(%arg0: i32) -> (i32, i32, i32) {
    %c0_i32 = arith.constant 0 : i32
    %c0_i32_0 = arith.constant 0 : i32
    %c0_i32_1 = arith.constant 0 : i32
    return %arg0, %c0_i32, %c0_i32_0 : i32, i32, i32
  }
}

</mosaic_0001>

<llo_original>
// kernel: tpu_custom_call.1
$region0: #{tpu_custom_call.1}
  #allocation0 [shape = 'u32[]', space=smem, size = 0x4, offset = 0x4, fixed_abs, tag = 'smem constant byte address 0x4 - core index']
  #allocation1 [shape = 'u32[144,128]{1,0:T(1,128)}', space=vmem, size = 0x12000, scoped, tag = 'internal scratch']
  #allocation2 [shape = 'f32[1,10,128]{2,1,0:T(8,128)}', space=vmem, size = 0x2000, scoped, tag = 'scratch operand']
  %s0 = inlined_call_operand.vmem [shape: f32[2,10,128], index: 0, kind: input, shape index: {}]
  %s1 = inlined_call_operand.hbm [shape: f32[384,256], index: 1, kind: input, shape index: {}]
  %s2 = inlined_call_operand.hbm [shape: f32[384,128], index: 2, kind: input, shape index: {}]
  %s3 = inlined_call_operand.vmem [shape: f32[6,8,128], index: 3, kind: input, shape index: {}]
  %s4 = inlined_call_operand.hbm [shape: f32[2,8,128], index: 4, kind: output, shape index: {}]
  %s5 = sld [smem:[#allocation0]]
  $region57: #{tpu_custom_call.1} parent=0
    _
  %s7 = ssub.s32 1, %s5
  %s8 = scalar_select 0, %s7, %s5
  $region1: #{tpu_custom_call.1} parent=0
    #allocation3 [shape = 'u8[393216]{0}', space=vmem, size = 0x60000, scoped, tag = 'input window, operand 1, single buffered']
    #allocation4 [shape = 's32[2]{0}', space=sflag, size = 0x8, scoped, tag = 'scoped memory for tpu_custom_call.1']
    #allocation5 [shape = 's32[2]{0}', space=sflag, size = 0x8, scoped, tag = 'scoped memory for tpu_custom_call.1']
    #allocation6 [shape = 'u8[196608]{0}', space=vmem, size = 0x30000, scoped, tag = 'input window, operand 2, single buffered']
    #allocation7 [shape = 's32[1]{0}', space=sflag, size = 0x4, scoped, tag = 'scoped memory for tpu_custom_call.1']
    #allocation8 [shape = 'u8[8192]{0}', space=vmem, size = 0x2000, scoped, tag = 'output window, operand 0']
    %9 = vsyncpa [#allocation4], 0
    %10 = vsyncpa [#allocation7], 0
    %11 = vsyncpa [#allocation5], 0
    %s12 = scalar_lea.sflag [#allocation5], 1
    %13 = vsyncpa %s12, 0
    loop: start=0, step=1, limit=4
    $region2: #{tpu_custom_call.1} parent=1 // loop_pre_header
      _
    $region3: #{tpu_custom_call.1} parent=1 // loop_header
      %s15 = sphi 0, %s19
      %p16 = scmp.ge.s32.totalorder %s15, 4
      %s25 = sphi 0, %s27
      %s28 = sphi 0, %s25
      %s29 = sphi 0, %s28
      %s45 = sphi 0, %s29
      %s49 = sphi 0, %s49
      %s51 = sphi 0, %s49
      %s52 = sphi 0, %s51
      %s66 = sphi 0, %s52
      %s70 = sphi 0, %s70
      %s72 = sphi 0, %s70
      %s73 = sphi 0, %s72
      %s87 = sphi 0, %s73
      %s91 = sphi 0, %s91
      %s93 = sphi 0, %s91
      %s94 = sphi 0, %s93
      %s108 = sphi 0, %s94
      %s114 = sphi 0, %s116
      %s117 = sphi 0, %s114
      %s118 = sphi 0, %s117
      %s134 = sphi 0, %s118
    $region4: #{tpu_custom_call.1} parent=1 // loop_header_branch
      %18 = sbr.rel (%p16) target = $region8
    $region5: #{tpu_custom_call.1} parent=1 // loop_body
      %s20 = ssub.s32 %s15, 1
      %s21 = ssub.s32 %s15, 2
      %s22 = sadd.s32 %s15, 1
      %s23 = ssub.s32 %s15, %s22
      %p24 = scmp.eq.s32.totalorder %s23, 0
      %s26 = sadd.s32 %s25, 1
      %s27 = scalar_select %p24, %s25, %s26
      %p30 = pneg %p24
      %p31 = scmp.eq.s32.totalorder %s15, 1
      %p32 = por %p30, %p31
      %p33 = scmp.ne.s32.totalorder %s25, %s28
      %p34 = scmp.eq.s32.totalorder %s15, 0
      %p35 = por %p33, %p34
      %p36 = scmp.ne.s32.totalorder %s25, %s28
      %p37 = scmp.eq.s32.totalorder %s20, 1
      %p38 = por %p36, %p37
      %p39 = scmp.ne.s32.totalorder %s28, %s29
      %p40 = scmp.eq.s32.totalorder %s20, 0
      %p41 = por %p39, %p40
      %p42 = scmp.ne.s32.totalorder %s28, %s29
      %p43 = scmp.eq.s32.totalorder %s21, 1
      %p44 = por %p42, %p43
      %p46 = scmp.ne.s32.totalorder %s29, %s45
      %p47 = scmp.eq.s32.totalorder %s21, 0
      %p48 = por %p46, %p47
      %s50 = sadd.s32 %s49, 1
      %p53 = scmp.eq.s32.totalorder %s15, 1
      %p54 = scmp.ne.s32.totalorder %s49, %s51
      %p55 = scmp.eq.s32.totalorder %s15, 0
      %p56 = por %p54, %p55
      %p57 = scmp.ne.s32.totalorder %s49, %s51
      %p58 = scmp.eq.s32.totalorder %s20, 1
      %p59 = por %p57, %p58
      %p60 = scmp.ne.s32.totalorder %s51, %s52
      %p61 = scmp.eq.s32.totalorder %s20, 0
      %p62 = por %p60, %p61
      %p63 = scmp.ne.s32.totalorder %s51, %s52
      %p64 = scmp.eq.s32.totalorder %s21, 1
      %p65 = por %p63, %p64
      %p67 = scmp.ne.s32.totalorder %s52, %s66
      %p68 = scmp.eq.s32.totalorder %s21, 0
      %p69 = por %p67, %p68
      %s71 = sadd.s32 %s70, 1
      %p74 = scmp.eq.s32.totalorder %s15, 1
      %p75 = scmp.ne.s32.totalorder %s70, %s72
      %p76 = scmp.eq.s32.totalorder %s15, 0
      %p77 = por %p75, %p76
      %p78 = scmp.ne.s32.totalorder %s70, %s72
      %p79 = scmp.eq.s32.totalorder %s20, 1
      %p80 = por %p78, %p79
      %p81 = scmp.ne.s32.totalorder %s72, %s73
      %p82 = scmp.eq.s32.totalorder %s20, 0
      %p83 = por %p81, %p82
      %p84 = scmp.ne.s32.totalorder %s72, %s73
      %p85 = scmp.eq.s32.totalorder %s21, 1
      %p86 = por %p84, %p85
      %p88 = scmp.ne.s32.totalorder %s73, %s87
      %p89 = scmp.eq.s32.totalorder %s21, 0
      %p90 = por %p88, %p89
      %s92 = sadd.s32 %s91, 1
      %p95 = scmp.eq.s32.totalorder %s15, 1
      %p96 = scmp.ne.s32.totalorder %s91, %s93
      %p97 = scmp.eq.s32.totalorder %s15, 0
      %p98 = por %p96, %p97
      %p99 = scmp.ne.s32.totalorder %s91, %s93
      %p100 = scmp.eq.s32.totalorder %s20, 1
      %p101 = por %p99, %p100
      %p102 = scmp.ne.s32.totalorder %s93, %s94
      %p103 = scmp.eq.s32.totalorder %s20, 0
      %p104 = por %p102, %p103
      %p105 = scmp.ne.s32.totalorder %s93, %s94
      %p106 = scmp.eq.s32.totalorder %s21, 1
      %p107 = por %p105, %p106
      %p109 = scmp.ne.s32.totalorder %s94, %s108
      %p110 = scmp.eq.s32.totalorder %s21, 0
      %p111 = por %p109, %p110
      %s112 = ssub.s32 %s15, %s22
      %p113 = scmp.eq.s32.totalorder %s112, 0
      %s115 = sadd.s32 %s114, 1
      %s116 = scalar_select %p113, %s114, %s115
      %p119 = pneg %p113
      %p120 = scmp.eq.s32.totalorder %s15, 1
      %p121 = por %p119, %p120
      %p122 = scmp.ne.s32.totalorder %s114, %s117
      %p123 = scmp.eq.s32.totalorder %s15, 0
      %p124 = por %p122, %p123
      %p125 = scmp.ne.s32.totalorder %s114, %s117
      %p126 = scmp.eq.s32.totalorder %s20, 1
      %p127 = por %p125, %p126
      %p128 = scmp.ne.s32.totalorder %s117, %s118
      %p129 = scmp.eq.s32.totalorder %s20, 0
      %p130 = por %p128, %p129
      %p131 = scmp.ne.s32.totalorder %s117, %s118
      %p132 = scmp.eq.s32.totalorder %s21, 1
      %p133 = por %p131, %p132
      %p135 = scmp.ne.s32.totalorder %s118, %s134
      %p136 = scmp.eq.s32.totalorder %s21, 0
      %p137 = por %p135, %p136
      %p138 = scmp.le.s32.totalorder 1, %s15
      %p139 = scmp.lt.s32.totalorder %s15, 3
      %p140 = pnand %p138, %p139
      %p141 = pneg %p140
      // Predicated region
      $region9: #{tpu_custom_call.1} parent=5 // pred_check
        _
      $region10: #{tpu_custom_call.1} parent=5 // pred_check_branch
        %143 = sbr.rel (%p140) target = $region12
      $region11: #{tpu_custom_call.1} parent=5 // pred_region
        %s144 = ssub.s32 %s15, 1
        // Predicated region
        $region13: #{tpu_custom_call.1} parent=11 // pred_check
          %p145 = pneg %p62
        $region14: #{tpu_custom_call.1} parent=11 // pred_check_branch
          %147 = sbr.rel (%p145) target = $region16
        $region15: #{tpu_custom_call.1} parent=11 // pred_region
          %s149 = ssub.s32 12288, 12288
          %150 = vsyncadd [#allocation4], %s149
          %s151 = sshll.u32 [#allocation3], 4
          %s152 = int_to_ptr.vmem [resolvable:$true] %s151
          %157 = dma.hbm_to_vmem [thread:$0]  %s1, 12288, %s152, [#allocation4], 256, 256, 16
        $region16: #{tpu_custom_call.1} parent=11 // pred_fallthru
          _
        // Predicated region
        $region17: #{tpu_custom_call.1} parent=11 // pred_check
          %p158 = pneg %p83
        $region18: #{tpu_custom_call.1} parent=11 // pred_check_branch
          %160 = sbr.rel (%p158) target = $region20
        $region19: #{tpu_custom_call.1} parent=11 // pred_region
          %s162 = ssub.s32 6144, 6144
          %163 = vsyncadd [#allocation7], %s162
          %s164 = sshll.u32 [#allocation6], 4
          %s165 = int_to_ptr.vmem [resolvable:$true] %s164
          %170 = dma.hbm_to_vmem [thread:$0]  %s2, 6144, %s165, [#allocation7], 128, 128, 8
        $region20: #{tpu_custom_call.1} parent=11 // pred_fallthru
          _
        // Predicated region
        $region21: #{tpu_custom_call.1} parent=11 // pred_check
          %p171 = pneg %p104
        $region22: #{tpu_custom_call.1} parent=11 // pred_check_branch
          %173 = sbr.rel (%p171) target = $region24
        $region23: #{tpu_custom_call.1} parent=11 // pred_region
          _
        $region24: #{tpu_custom_call.1} parent=11 // pred_fallthru
          _
      $region12: #{tpu_custom_call.1} parent=5 // pred_fallthru
        _
      %p174 = scmp.lt.s32.totalorder %s15, 2
      // Predicated region
      $region25: #{tpu_custom_call.1} parent=5 // pred_check
        %p175 = pneg %p174
      $region26: #{tpu_custom_call.1} parent=5 // pred_check_branch
        %177 = sbr.rel (%p175) target = $region28
      $region27: #{tpu_custom_call.1} parent=5 // pred_region
        // Predicated region
        $region29: #{tpu_custom_call.1} parent=27 // pred_check
          %p178 = pneg %p35
        $region30: #{tpu_custom_call.1} parent=27 // pred_check_branch
          %180 = sbr.rel (%p178) target = $region32
        $region31: #{tpu_custom_call.1} parent=27 // pred_region
          %p181 = scmp.lt.s32.totalorder %s15, 1
          %s182 = scalar_select %p181, %s15, 1
          %s183 = smul.addr %s182, 2
          %s184 = smul.addr %s183, 8
          %s185 = scalar_lea.vmem %s0, %s184
        $region32: #{tpu_custom_call.1} parent=27 // pred_fallthru
          _
      $region28: #{tpu_custom_call.1} parent=5 // pred_fallthru
        _
      %p186 = scmp.le.s32.totalorder 1, %s15
      %p187 = scmp.lt.s32.totalorder %s15, 3
      %p188 = pnand %p186, %p187
      %p189 = pneg %p188
      // Predicated region
      $region33: #{tpu_custom_call.1} parent=5 // pred_check
        _
      $region34: #{tpu_custom_call.1} parent=5 // pred_check_branch
        %191 = sbr.rel (%p188) target = $region36
      $region35: #{tpu_custom_call.1} parent=5 // pred_region
        %s192 = ssub.s32 %s15, 1
        // Predicated region
        $region37: #{tpu_custom_call.1} parent=35 // pred_check
          %p193 = pneg %p62
        $region38: #{tpu_custom_call.1} parent=35 // pred_check_branch
          %195 = sbr.rel (%p193) target = $region40
        $region39: #{tpu_custom_call.1} parent=35 // pred_region
          %196 = dma.done [#allocation4], 12288
        $region40: #{tpu_custom_call.1} parent=35 // pred_fallthru
          _
        // Predicated region
        $region41: #{tpu_custom_call.1} parent=35 // pred_check
          %p197 = pneg %p83
        $region42: #{tpu_custom_call.1} parent=35 // pred_check_branch
          %199 = sbr.rel (%p197) target = $region44
        $region43: #{tpu_custom_call.1} parent=35 // pred_region
          %200 = dma.done [#allocation7], 6144
        $region44: #{tpu_custom_call.1} parent=35 // pred_fallthru
          _
        %p201 = scmp.lt.s32.totalorder %s20, 1
        %s202 = scalar_select %p201, %s20, 1
        %s203 = smul.addr %s202, 2
        %s204 = smul.addr %s203, 8
        %s205 = scalar_lea.vmem %s0, %s204
        %p206 = pneg %p41
        %p207 = pneg %p38
        %p208 = pneg %p62
        %p209 = pneg %p59
        %p210 = pneg %p83
        %p211 = pneg %p80
        %p212 = pneg %p104
        %p213 = pneg %p101
        %p214 = pneg %p130
        %p215 = pneg %p127
        %s216 = sand.u32 %s117, 1
        %s217 = scalar_lea.sflag [#allocation5], %s216
        %s218 = sand.u32 %s117, 1
        %s219 = smul.addr %s218, 8
        %s220 = scalar_lea.vmem [#allocation8], %s219
        %p221 = scmp.lt.s32.totalorder %s20, 1
        %s222 = scalar_select %p221, %s20, 1
        %s223 = smul.addr %s222, 2
        %s224 = smul.addr %s223, 8
        %s225 = scalar_lea.vmem %s0, %s224
        %v226 = vld [vmem:[%s225] sm:$0xff]
        %v227 = vld [vmem:[%s225 + $0x1] sm:$0xff]
        %v228 = vld [vmem:[%s225 + $0x2] sm:$0xff]
        %v229 = vld [vmem:[#allocation3] sm:$0xff]
        %v230 = vld [vmem:[#allocation3 + $0x8] sm:$0xff]
        %v231 = vld [vmem:[#allocation3 + $0x10] sm:$0xff]
        %v232 = vld [vmem:[#allocation3 + $0x18] sm:$0xff]
        %v233 = vld [vmem:[#allocation3 + $0x20] sm:$0xff]
        %v234 = vld [vmem:[#allocation3 + $0x28] sm:$0xff]
        %v235 = vld [vmem:[#allocation3 + $0x30] sm:$0xff]
        %v236 = vld [vmem:[#allocation3 + $0x38] sm:$0xff]
        %v237 = vld [vmem:[#allocation3 + $0x40] sm:$0xff]
        %v238 = vld [vmem:[#allocation3 + $0x48] sm:$0xff]
        %v239 = vld [vmem:[#allocation3 + $0x50] sm:$0xff]
        %v240 = vld [vmem:[#allocation3 + $0x58] sm:$0xff]
        %v241 = vld [vmem:[#allocation3 + $0x60] sm:$0xff]
        %v242 = vld [vmem:[#allocation3 + $0x68] sm:$0xff]
        %v243 = vld [vmem:[#allocation3 + $0x70] sm:$0xff]
        %v244 = vld [vmem:[#allocation3 + $0x78] sm:$0xff]
        %v245 = vld [vmem:[#allocation3 + $0x80] sm:$0xff]
        %v246 = vld [vmem:[#allocation3 + $0x88] sm:$0xff]
        %v247 = vld [vmem:[#allocation3 + $0x90] sm:$0xff]
        %v248 = vld [vmem:[#allocation3 + $0x98] sm:$0xff]
        %v249 = vld [vmem:[#allocation3 + $0xa0] sm:$0xff]
        %v250 = vld [vmem:[#allocation3 + $0xa8] sm:$0xff]
        %v251 = vld [vmem:[#allocation3 + $0xb0] sm:$0xff]
        %v252 = vld [vmem:[#allocation3 + $0xb8] sm:$0xff]
        %v253 = vld [vmem:[#allocation3 + $0xc0] sm:$0xff]
        %v254 = vld [vmem:[#allocation3 + $0xc8] sm:$0xff]
        %v255 = vld [vmem:[#allocation3 + $0xd0] sm:$0xff]
        %v256 = vld [vmem:[#allocation3 + $0xd8] sm:$0xff]
        %v257 = vld [vmem:[#allocation3 + $0xe0] sm:$0xff]
        %v258 = vld [vmem:[#allocation3 + $0xe8] sm:$0xff]
        %v259 = vld [vmem:[#allocation3 + $0xf0] sm:$0xff]
        %v260 = vld [vmem:[#allocation3 + $0xf8] sm:$0xff]
        %v261 = vld [vmem:[#allocation3 + $0x100] sm:$0xff]
        %v262 = vld [vmem:[#allocation3 + $0x108] sm:$0xff]
        %v263 = vld [vmem:[#allocation3 + $0x110] sm:$0xff]
        %v264 = vld [vmem:[#allocation3 + $0x118] sm:$0xff]
        %v265 = vld [vmem:[#allocation3 + $0x120] sm:$0xff]
        %v266 = vld [vmem:[#allocation3 + $0x128] sm:$0xff]
        %v267 = vld [vmem:[#allocation3 + $0x130] sm:$0xff]
        %v268 = vld [vmem:[#allocation3 + $0x138] sm:$0xff]
        %v269 = vld [vmem:[#allocation3 + $0x140] sm:$0xff]
        %v270 = vld [vmem:[#allocation3 + $0x148] sm:$0xff]
        %v271 = vld [vmem:[#allocation3 + $0x150] sm:$0xff]
        %v272 = vld [vmem:[#allocation3 + $0x158] sm:$0xff]
        %v273 = vld [vmem:[#allocation3 + $0x160] sm:$0xff]
        %v274 = vld [vmem:[#allocation3 + $0x168] sm:$0xff]
        %v275 = vld [vmem:[#allocation3 + $0x170] sm:$0xff]
        %v276 = vld [vmem:[#allocation3 + $0x178] sm:$0xff]
        %v277 = vld [vmem:[#allocation3 + $0x180] sm:$0xff]
        %v278 = vld [vmem:[#allocation3 + $0x188] sm:$0xff]
        %v279 = vld [vmem:[#allocation3 + $0x190] sm:$0xff]
        %v280 = vld [vmem:[#allocation3 + $0x198] sm:$0xff]
        %v281 = vld [vmem:[#allocation3 + $0x1a0] sm:$0xff]
        %v282 = vld [vmem:[#allocation3 + $0x1a8] sm:$0xff]
        %v283 = vld [vmem:[#allocation3 + $0x1b0] sm:$0xff]
        %v284 = vld [vmem:[#allocation3 + $0x1b8] sm:$0xff]
        %v285 = vld [vmem:[#allocation3 + $0x1c0] sm:$0xff]
        %v286 = vld [vmem:[#allocation3 + $0x1c8] sm:$0xff]
        %v287 = vld [vmem:[#allocation3 + $0x1d0] sm:$0xff]
        %v288 = vld [vmem:[#allocation3 + $0x1d8] sm:$0xff]
        %v289 = vld [vmem:[#allocation3 + $0x1e0] sm:$0xff]
        %v290 = vld [vmem:[#allocation3 + $0x1e8] sm:$0xff]
        %v291 = vld [vmem:[#allocation3 + $0x1f0] sm:$0xff]
        %v292 = vld [vmem:[#allocation3 + $0x1f8] sm:$0xff]
        %v293 = vld [vmem:[#allocation3 + $0x200] sm:$0xff]
        %v294 = vld [vmem:[#allocation3 + $0x208] sm:$0xff]
        %v295 = vld [vmem:[#allocation3 + $0x210] sm:$0xff]
        %v296 = vld [vmem:[#allocation3 + $0x218] sm:$0xff]
        %v297 = vld [vmem:[#allocation3 + $0x220] sm:$0xff]
        %v298 = vld [vmem:[#allocation3 + $0x228] sm:$0xff]
        %v299 = vld [vmem:[#allocation3 + $0x230] sm:$0xff]
        %v300 = vld [vmem:[#allocation3 + $0x238] sm:$0xff]
        %v301 = vld [vmem:[#allocation3 + $0x240] sm:$0xff]
        %v302 = vld [vmem:[#allocation3 + $0x248] sm:$0xff]
        %v303 = vld [vmem:[#allocation3 + $0x250] sm:$0xff]
        %v304 = vld [vmem:[#allocation3 + $0x258] sm:$0xff]
        %v305 = vld [vmem:[#allocation3 + $0x260] sm:$0xff]
        %v306 = vld [vmem:[#allocation3 + $0x268] sm:$0xff]
        %v307 = vld [vmem:[#allocation3 + $0x270] sm:$0xff]
        %v308 = vld [vmem:[#allocation3 + $0x278] sm:$0xff]
        %v309 = vld [vmem:[#allocation3 + $0x280] sm:$0xff]
        %v310 = vld [vmem:[#allocation3 + $0x288] sm:$0xff]
        %v311 = vld [vmem:[#allocation3 + $0x290] sm:$0xff]
        %v312 = vld [vmem:[#allocation3 + $0x298] sm:$0xff]
        %v313 = vld [vmem:[#allocation3 + $0x2a0] sm:$0xff]
        %v314 = vld [vmem:[#allocation3 + $0x2a8] sm:$0xff]
        %v315 = vld [vmem:[#allocation3 + $0x2b0] sm:$0xff]
        %v316 = vld [vmem:[#allocation3 + $0x2b8] sm:$0xff]
        %v317 = vld [vmem:[#allocation3 + $0x2c0] sm:$0xff]
        %v318 = vld [vmem:[#allocation3 + $0x2c8] sm:$0xff]
        %v319 = vld [vmem:[#allocation3 + $0x2d0] sm:$0xff]
        %v320 = vld [vmem:[#allocation3 + $0x2d8] sm:$0xff]
        %v321 = vld [vmem:[#allocation3 + $0x2e0] sm:$0xff]
        %v322 = vld [vmem:[#allocation3 + $0x2e8] sm:$0xff]
        %v323 = vld [vmem:[#allocation3 + $0x2f0] sm:$0xff]
        %v324 = vld [vmem:[#allocation3 + $0x2f8] sm:$0xff]
        %325 = vmatprep.subr.mxu0 %v230
        %326 = vmatpush1.msra.mxu0 %v229
        %327 = vmatprep.subr.mxu0 %v232
        %328 = vmatpush1.msra.mxu0 %v231
        %329 = vmatprep.subr.mxu0 %v234
        %330 = vmatpush1.msra.mxu0 %v233
        %331 = vmatprep.subr.mxu0 %v236
        %332 = vmatpush1.msra.mxu0 %v235
        %333 = vmatprep.subr.mxu0 %v238
        %334 = vmatpush1.msra.mxu0 %v237
        %335 = vmatprep.subr.mxu0 %v240
        %336 = vmatpush1.msra.mxu0 %v239
        %337 = vmatprep.subr.mxu0 %v242
        %338 = vmatpush1.msra.mxu0 %v241
        %339 = vmatprep.subr.mxu0 %v244
        %340 = vmatpush1.msra.mxu0 %v243
        %341 = vmatprep.subr.mxu0 %v246
        %342 = vmatpush1.msra.mxu0 %v245
        %343 = vmatprep.subr.mxu0 %v248
        %344 = vmatpush1.msra.mxu0 %v247
        %345 = vmatprep.subr.mxu0 %v250
        %346 = vmatpush1.msra.mxu0 %v249
        %347 = vmatprep.subr.mxu0 %v252
        %348 = vmatpush1.msra.mxu0 %v251
        %349 = vmatprep.subr.mxu0 %v254
        %350 = vmatpush1.msra.mxu0 %v253
        %351 = vmatprep.subr.mxu0 %v256
        %352 = vmatpush1.msra.mxu0 %v255
        %353 = vmatprep.subr.mxu0 %v258
        %354 = vmatpush1.msra.mxu0 %v257
        %355 = vmatprep.subr.mxu0 %v260
        %356 = vmatpush1.msra.mxu0 %v259
        %357 = vmatprep.subr.mxu0 %v262
        %358 = vmatpush1.msra.mxu0 %v261
        %359 = vmatprep.subr.mxu0 %v264
        %360 = vmatpush1.msra.mxu0 %v263
        %361 = vmatprep.subr.mxu0 %v266
        %362 = vmatpush1.msra.mxu0 %v265
        %363 = vmatprep.subr.mxu0 %v268
        %364 = vmatpush1.msra.mxu0 %v267
        %365 = vmatprep.subr.mxu0 %v270
        %366 = vmatpush1.msra.mxu0 %v269
        %367 = vmatprep.subr.mxu0 %v272
        %368 = vmatpush1.msra.mxu0 %v271
        %369 = vmatprep.subr.mxu0 %v274
        %370 = vmatpush1.msra.mxu0 %v273
        %371 = vmatprep.subr.mxu0 %v276
        %372 = vmatpush1.msra.mxu0 %v275
        %373 = vmatprep.subr.mxu0 %v278
        %374 = vmatpush1.msra.mxu0 %v277
        %375 = vmatprep.subr.mxu0 %v280
        %376 = vmatpush1.msra.mxu0 %v279
        %377 = vmatprep.subr.mxu0 %v282
        %378 = vmatpush1.msra.mxu0 %v281
        %379 = vmatprep.subr.mxu0 %v284
        %380 = vmatpush1.msra.mxu0 %v283
        %381 = vmatprep.subr.mxu0 %v286
        %382 = vmatpush1.msra.mxu0 %v285
        %383 = vmatprep.subr.mxu0 %v288
        %384 = vmatpush1.msra.mxu0 %v287
        %385 = vmatprep.subr.mxu0 %v290
        %386 = vmatpush1.msra.mxu0 %v289
        %387 = vmatprep.subr.mxu0 %v292
        %388 = vmatpush1.msra.mxu0 %v291
        %389 = vmatprep.mubr.f32.mxu0 %v227
        %390 = vmatmul.mubr.f32.gmra.mrb[0].mxu0 %v226
        %v391 = vpop.f32.mrb[0].mxu0
        %v392 = vadd.f32 0.0, %v391
        %v393 = vpop.f32.mrb[0].mxu0
        %v394 = vadd.f32 0.0, %v393
        %395 = vdwg.mxu0
        %396 = vmatprep.subr.mxu0 %v294
        %397 = vmatpush1.msra.mxu0 %v293
        %398 = vmatprep.subr.mxu0 %v296
        %399 = vmatpush1.msra.mxu0 %v295
        %400 = vmatprep.subr.mxu0 %v298
        %401 = vmatpush1.msra.mxu0 %v297
        %402 = vmatprep.subr.mxu0 %v300
        %403 = vmatpush1.msra.mxu0 %v299
        %404 = vmatprep.subr.mxu0 %v302
        %405 = vmatpush1.msra.mxu0 %v301
        %406 = vmatprep.subr.mxu0 %v304
        %407 = vmatpush1.msra.mxu0 %v303
        %408 = vmatprep.subr.mxu0 %v306
        %409 = vmatpush1.msra.mxu0 %v305
        %410 = vmatprep.subr.mxu0 %v308
        %411 = vmatpush1.msra.mxu0 %v307
        %412 = vmatprep.subr.mxu0 %v310
        %413 = vmatpush1.msra.mxu0 %v309
        %414 = vmatprep.subr.mxu0 %v312
        %415 = vmatpush1.msra.mxu0 %v311
        %416 = vmatprep.subr.mxu0 %v314
        %417 = vmatpush1.msra.mxu0 %v313
        %418 = vmatprep.subr.mxu0 %v316
        %419 = vmatpush1.msra.mxu0 %v315
        %420 = vmatprep.subr.mxu0 %v318
        %421 = vmatpush1.msra.mxu0 %v317
        %422 = vmatprep.subr.mxu0 %v320
        %423 = vmatpush1.msra.mxu0 %v319
        %424 = vmatprep.subr.mxu0 %v322
        %425 = vmatpush1.msra.mxu0 %v321
        %426 = vmatprep.subr.mxu0 %v324
        %427 = vmatpush1.msra.mxu0 %v323
        %428 = vmatprep.subr.mxu0 0.0
        %429 = vmatpush1.msra.mxu0 0.0
        %430 = vmatprep.subr.mxu0 0.0
        %431 = vmatpush1.msra.mxu0 0.0
        %432 = vmatprep.subr.mxu0 0.0
        %433 = vmatpush1.msra.mxu0 0.0
        %434 = vmatprep.subr.mxu0 0.0
        %435 = vmatpush1.msra.mxu0 0.0
        %436 = vmatprep.subr.mxu0 0.0
        %437 = vmatpush1.msra.mxu0 0.0
        %438 = vmatprep.subr.mxu0 0.0
        %439 = vmatpush1.msra.mxu0 0.0
        %440 = vmatprep.subr.mxu0 0.0
        %441 = vmatpush1.msra.mxu0 0.0
        %442 = vmatprep.subr.mxu0 0.0
        %443 = vmatpush1.msra.mxu0 0.0
        %444 = vmatprep.subr.mxu0 0.0
        %445 = vmatpush1.msra.mxu0 0.0
        %446 = vmatprep.subr.mxu0 0.0
        %447 = vmatpush1.msra.mxu0 0.0
        %448 = vmatprep.subr.mxu0 0.0
        %449 = vmatpush1.msra.mxu0 0.0
        %450 = vmatprep.subr.mxu0 0.0
        %451 = vmatpush1.msra.mxu0 0.0
        %452 = vmatprep.subr.mxu0 0.0
        %453 = vmatpush1.msra.mxu0 0.0
        %454 = vmatprep.subr.mxu0 0.0
        %455 = vmatpush1.msra.mxu0 0.0
        %456 = vmatprep.subr.mxu0 0.0
        %457 = vmatpush1.msra.mxu0 0.0
        %458 = vmatprep.subr.mxu0 0.0
        %459 = vmatpush1.msra.mxu0 0.0
        %460 = vmatprep.mubr.f32.mxu0 0.0
        %461 = vmatmul.mubr.f32.gmra.mrb[0].mxu0 %v228
        %v462 = vpop.f32.mrb[0].mxu0
        %v463 = vadd.f32 %v392, %v462
        %v464 = vpop.f32.mrb[0].mxu0
        %v465 = vadd.f32 %v394, %v464
        %466 = vdwg.mxu0
        %v467 = vld [vmem:[%s3] sm:$0xff]
        %v468 = vmul.f32 %v463, %v467
        %s469 = scalar_lea.vmem %s3, 8
        %v470 = vld [vmem:[%s469] sm:$0xff]
        %v471 = vadd.f32 %v468, %v470
        %v472 = vmax.f32 %v471, 0.0
        %473 = vst [vmem:[#allocation2] sm:$0x3] 0.0
        %474 = vst [vmem:[#allocation2 + $0x2] sm:$0xff] %v472
        %v475 = vld [vmem:[#allocation2] sm:$0xff]
        %v476 = vld [vmem:[#allocation2 + $0x1] sm:$0xff]
        %v477 = vld [vmem:[#allocation2 + $0x2] sm:$0xff]
        %v478 = vld [vmem:[#allocation6] sm:$0xff]
        %v479 = vld [vmem:[#allocation6 + $0x8] sm:$0xff]
        %v480 = vld [vmem:[#allocation6 + $0x10] sm:$0xff]
        %v481 = vld [vmem:[#allocation6 + $0x18] sm:$0xff]
        %v482 = vld [vmem:[#allocation6 + $0x20] sm:$0xff]
        %v483 = vld [vmem:[#allocation6 + $0x28] sm:$0xff]
        %v484 = vld [vmem:[#allocation6 + $0x30] sm:$0xff]
        %v485 = vld [vmem:[#allocation6 + $0x38] sm:$0xff]
        %v486 = vld [vmem:[#allocation6 + $0x40] sm:$0xff]
        %v487 = vld [vmem:[#allocation6 + $0x48] sm:$0xff]
        %v488 = vld [vmem:[#allocation6 + $0x50] sm:$0xff]
        %v489 = vld [vmem:[#allocation6 + $0x58] sm:$0xff]
        %v490 = vld [vmem:[#allocation6 + $0x60] sm:$0xff]
        %v491 = vld [vmem:[#allocation6 + $0x68] sm:$0xff]
        %v492 = vld [vmem:[#allocation6 + $0x70] sm:$0xff]
        %v493 = vld [vmem:[#allocation6 + $0x78] sm:$0xff]
        %v494 = vld [vmem:[#allocation6 + $0x80] sm:$0xff]
        %v495 = vld [vmem:[#allocation6 + $0x88] sm:$0xff]
        %v496 = vld [vmem:[#allocation6 + $0x90] sm:$0xff]
        %v497 = vld [vmem:[#allocation6 + $0x98] sm:$0xff]
        %v498 = vld [vmem:[#allocation6 + $0xa0] sm:$0xff]
        %v499 = vld [vmem:[#allocation6 + $0xa8] sm:$0xff]
        %v500 = vld [vmem:[#allocation6 + $0xb0] sm:$0xff]
        %v501 = vld [vmem:[#allocation6 + $0xb8] sm:$0xff]
        %v502 = vld [vmem:[#allocation6 + $0xc0] sm:$0xff]
        %v503 = vld [vmem:[#allocation6 + $0xc8] sm:$0xff]
        %v504 = vld [vmem:[#allocation6 + $0xd0] sm:$0xff]
        %v505 = vld [vmem:[#allocation6 + $0xd8] sm:$0xff]
        %v506 = vld [vmem:[#allocation6 + $0xe0] sm:$0xff]
        %v507 = vld [vmem:[#allocation6 + $0xe8] sm:$0xff]
        %v508 = vld [vmem:[#allocation6 + $0xf0] sm:$0xff]
        %v509 = vld [vmem:[#allocation6 + $0xf8] sm:$0xff]
        %v510 = vld [vmem:[#allocation6 + $0x100] sm:$0xff]
        %v511 = vld [vmem:[#allocation6 + $0x108] sm:$0xff]
        %v512 = vld [vmem:[#allocation6 + $0x110] sm:$0xff]
        %v513 = vld [vmem:[#allocation6 + $0x118] sm:$0xff]
        %v514 = vld [vmem:[#allocation6 + $0x120] sm:$0xff]
        %v515 = vld [vmem:[#allocation6 + $0x128] sm:$0xff]
        %v516 = vld [vmem:[#allocation6 + $0x130] sm:$0xff]
        %v517 = vld [vmem:[#allocation6 + $0x138] sm:$0xff]
        %v518 = vld [vmem:[#allocation6 + $0x140] sm:$0xff]
        %v519 = vld [vmem:[#allocation6 + $0x148] sm:$0xff]
        %v520 = vld [vmem:[#allocation6 + $0x150] sm:$0xff]
        %v521 = vld [vmem:[#allocation6 + $0x158] sm:$0xff]
        %v522 = vld [vmem:[#allocation6 + $0x160] sm:$0xff]
        %v523 = vld [vmem:[#allocation6 + $0x168] sm:$0xff]
        %v524 = vld [vmem:[#allocation6 + $0x170] sm:$0xff]
        %v525 = vld [vmem:[#allocation6 + $0x178] sm:$0xff]
        %526 = vmatprep.subr.mxu0 0.0
        %527 = vmatpush1.msra.mxu0 %v478
        %528 = vmatprep.subr.mxu0 0.0
        %529 = vmatpush1.msra.mxu0 %v479
        %530 = vmatprep.subr.mxu0 0.0
        %531 = vmatpush1.msra.mxu0 %v480
        %532 = vmatprep.subr.mxu0 0.0
        %533 = vmatpush1.msra.mxu0 %v481
        %534 = vmatprep.subr.mxu0 0.0
        %535 = vmatpush1.msra.mxu0 %v482
        %536 = vmatprep.subr.mxu0 0.0
        %537 = vmatpush1.msra.mxu0 %v483
        %538 = vmatprep.subr.mxu0 0.0
        %539 = vmatpush1.msra.mxu0 %v484
        %540 = vmatprep.subr.mxu0 0.0
        %541 = vmatpush1.msra.mxu0 %v485
        %542 = vmatprep.subr.mxu0 0.0
        %543 = vmatpush1.msra.mxu0 %v486
        %544 = vmatprep.subr.mxu0 0.0
        %545 = vmatpush1.msra.mxu0 %v487
        %546 = vmatprep.subr.mxu0 0.0
        %547 = vmatpush1.msra.mxu0 %v488
        %548 = vmatprep.subr.mxu0 0.0
        %549 = vmatpush1.msra.mxu0 %v489
        %550 = vmatprep.subr.mxu0 0.0
        %551 = vmatpush1.msra.mxu0 %v490
        %552 = vmatprep.subr.mxu0 0.0
        %553 = vmatpush1.msra.mxu0 %v491
        %554 = vmatprep.subr.mxu0 0.0
        %555 = vmatpush1.msra.mxu0 %v492
        %556 = vmatprep.subr.mxu0 0.0
        %557 = vmatpush1.msra.mxu0 %v493
        %558 = vmatprep.subr.mxu0 0.0
        %559 = vmatpush1.msra.mxu0 %v494
        %560 = vmatprep.subr.mxu0 0.0
        %561 = vmatpush1.msra.mxu0 %v495
        %562 = vmatprep.subr.mxu0 0.0
        %563 = vmatpush1.msra.mxu0 %v496
        %564 = vmatprep.subr.mxu0 0.0
        %565 = vmatpush1.msra.mxu0 %v497
        %566 = vmatprep.subr.mxu0 0.0
        %567 = vmatpush1.msra.mxu0 %v498
        %568 = vmatprep.subr.mxu0 0.0
        %569 = vmatpush1.msra.mxu0 %v499
        %570 = vmatprep.subr.mxu0 0.0
        %571 = vmatpush1.msra.mxu0 %v500
        %572 = vmatprep.subr.mxu0 0.0
        %573 = vmatpush1.msra.mxu0 %v501
        %574 = vmatprep.subr.mxu0 0.0
        %575 = vmatpush1.msra.mxu0 %v502
        %576 = vmatprep.subr.mxu0 0.0
        %577 = vmatpush1.msra.mxu0 %v503
        %578 = vmatprep.subr.mxu0 0.0
        %579 = vmatpush1.msra.mxu0 %v504
        %580 = vmatprep.subr.mxu0 0.0
        %581 = vmatpush1.msra.mxu0 %v505
        %582 = vmatprep.subr.mxu0 0.0
        %583 = vmatpush1.msra.mxu0 %v506
        %584 = vmatprep.subr.mxu0 0.0
        %585 = vmatpush1.msra.mxu0 %v507
        %586 = vmatprep.subr.mxu0 0.0
        %587 = vmatpush1.msra.mxu0 %v508
        %588 = vmatprep.subr.mxu0 0.0
        %589 = vmatpush1.msra.mxu0 %v509
        %590 = vmatprep.mubr.f32.mxu0 %v476
        %591 = vmatmul.mubr.f32.gmra.mrb[0].mxu0 %v475
        %v592 = vpop.f32.mrb[0].mxu0
        %v593 = vadd.f32 0.0, %v592
        %v594 = vpop.f32.mrb[0].mxu0
        %595 = vdwg.mxu0
        %596 = vmatprep.subr.mxu0 0.0
        %597 = vmatpush1.msra.mxu0 %v510
        %598 = vmatprep.subr.mxu0 0.0
        %599 = vmatpush1.msra.mxu0 %v511
        %600 = vmatprep.subr.mxu0 0.0
        %601 = vmatpush1.msra.mxu0 %v512
        %602 = vmatprep.subr.mxu0 0.0
        %603 = vmatpush1.msra.mxu0 %v513
        %604 = vmatprep.subr.mxu0 0.0
        %605 = vmatpush1.msra.mxu0 %v514
        %606 = vmatprep.subr.mxu0 0.0
        %607 = vmatpush1.msra.mxu0 %v515
        %608 = vmatprep.subr.mxu0 0.0
        %609 = vmatpush1.msra.mxu0 %v516
        %610 = vmatprep.subr.mxu0 0.0
        %611 = vmatpush1.msra.mxu0 %v517
        %612 = vmatprep.subr.mxu0 0.0
        %613 = vmatpush1.msra.mxu0 %v518
        %614 = vmatprep.subr.mxu0 0.0
        %615 = vmatpush1.msra.mxu0 %v519
        %616 = vmatprep.subr.mxu0 0.0
        %617 = vmatpush1.msra.mxu0 %v520
        %618 = vmatprep.subr.mxu0 0.0
        %619 = vmatpush1.msra.mxu0 %v521
        %620 = vmatprep.subr.mxu0 0.0
        %621 = vmatpush1.msra.mxu0 %v522
        %622 = vmatprep.subr.mxu0 0.0
        %623 = vmatpush1.msra.mxu0 %v523
        %624 = vmatprep.subr.mxu0 0.0
        %625 = vmatpush1.msra.mxu0 %v524
        %626 = vmatprep.subr.mxu0 0.0
        %627 = vmatpush1.msra.mxu0 %v525
        %628 = vmatprep.subr.mxu0 0.0
        %629 = vmatpush1.msra.mxu0 0.0
        %630 = vmatprep.subr.mxu0 0.0
        %631 = vmatpush1.msra.mxu0 0.0
        %632 = vmatprep.subr.mxu0 0.0
        %633 = vmatpush1.msra.mxu0 0.0
        %634 = vmatprep.subr.mxu0 0.0
        %635 = vmatpush1.msra.mxu0 0.0
        %636 = vmatprep.subr.mxu0 0.0
        %637 = vmatpush1.msra.mxu0 0.0
        %638 = vmatprep.subr.mxu0 0.0
        %639 = vmatpush1.msra.mxu0 0.0
        %640 = vmatprep.subr.mxu0 0.0
        %641 = vmatpush1.msra.mxu0 0.0
        %642 = vmatprep.subr.mxu0 0.0
        %643 = vmatpush1.msra.mxu0 0.0
        %644 = vmatprep.subr.mxu0 0.0
        %645 = vmatpush1.msra.mxu0 0.0
        %646 = vmatprep.subr.mxu0 0.0
        %647 = vmatpush1.msra.mxu0 0.0
        %648 = vmatprep.subr.mxu0 0.0
        %649 = vmatpush1.msra.mxu0 0.0
        %650 = vmatprep.subr.mxu0 0.0
        %651 = vmatpush1.msra.mxu0 0.0
        %652 = vmatprep.subr.mxu0 0.0
        %653 = vmatpush1.msra.mxu0 0.0
        %654 = vmatprep.subr.mxu0 0.0
        %655 = vmatpush1.msra.mxu0 0.0
        %656 = vmatprep.subr.mxu0 0.0
        %657 = vmatpush1.msra.mxu0 0.0
        %658 = vmatprep.subr.mxu0 0.0
        %659 = vmatpush1.msra.mxu0 0.0
        %660 = vmatprep.mubr.f32.mxu0 0.0
        %661 = vmatmul.mubr.f32.gmra.mrb[0].mxu0 %v477
        %v662 = vpop.f32.mrb[0].mxu0
        %v663 = vadd.f32 %v593, %v662
        %v664 = vpop.f32.mrb[0].mxu0
        %665 = vdwg.mxu0
        %s666 = scalar_lea.vmem %s3, 16
        %v667 = vld [vmem:[%s666] sm:$0xff]
        %v668 = vmul.f32 %v663, %v667
        %s669 = scalar_lea.vmem %s3, 24
        %v670 = vld [vmem:[%s669] sm:$0xff]
        %v671 = vadd.f32 %v668, %v670
        %v672 = vmax.f32 %v671, 0.0
        %v673 = vadd.f32 %v465, %v672
        %s674 = scalar_lea.vmem %s3, 32
        %v675 = vld [vmem:[%s674] sm:$0xff]
        %v676 = vmul.f32 %v673, %v675
        %s677 = scalar_lea.vmem %s3, 40
        %v678 = vld [vmem:[%s677] sm:$0xff]
        %v679 = vadd.f32 %v676, %v678
        %v680 = vmax.f32 %v679, 0.0
        %681 = vst [vmem:[%s220] sm:$0xff] %v680
        %s682 = sand.u32 %s117, 1
        %s683 = scalar_lea.sflag [#allocation5], %s682
        %s684 = sand.u32 %s117, 1
        %s685 = smul.addr %s684, 8
        %s686 = scalar_lea.vmem [#allocation8], %s685
        // Predicated region
        $region45: #{tpu_custom_call.1} parent=35 // pred_check
          %p687 = pneg %p127
        $region46: #{tpu_custom_call.1} parent=35 // pred_check_branch
          %689 = sbr.rel (%p687) target = $region48
        $region47: #{tpu_custom_call.1} parent=35 // pred_region
          %s691 = ssub.s32 128, 128
          %692 = vsyncadd %s683, %s691
          %s693 = smul.addr %s20, 128
          %s694 = scalar_lea.hbm %s4, %s693
          %s696 = sshll.u32 %s686, 4
          %s697 = int_to_ptr.vmem [resolvable:$true] %s696
          %699 = dma.vmem_to_hbm [thread:$0]  %s697, 128, %s694, %s683
        $region48: #{tpu_custom_call.1} parent=35 // pred_fallthru
          _
      $region36: #{tpu_custom_call.1} parent=5 // pred_fallthru
        _
      %p700 = scmp.le.s32.totalorder 2, %s15
      // Predicated region
      $region49: #{tpu_custom_call.1} parent=5 // pred_check
        %p701 = pneg %p700
      $region50: #{tpu_custom_call.1} parent=5 // pred_check_branch
        %703 = sbr.rel (%p701) target = $region52
      $region51: #{tpu_custom_call.1} parent=5 // pred_region
        %s704 = ssub.s32 %s15, 2
        // Predicated region
        $region53: #{tpu_custom_call.1} parent=51 // pred_check
          %p705 = pneg %p133
        $region54: #{tpu_custom_call.1} parent=51 // pred_check_branch
          %707 = sbr.rel (%p705) target = $region56
        $region55: #{tpu_custom_call.1} parent=51 // pred_region
          %s708 = sand.u32 %s118, 1
          %s709 = scalar_lea.sflag [#allocation5], %s708
          %s710 = sand.u32 %s118, 1
          %s711 = smul.addr %s710, 8
          %s712 = scalar_lea.vmem [#allocation8], %s711
          %713 = dma.done %s709, 128
        $region56: #{tpu_custom_call.1} parent=51 // pred_fallthru
          _
      $region52: #{tpu_custom_call.1} parent=5 // pred_fallthru
        _
    $region6: #{tpu_custom_call.1} parent=1 // loop_footer
      %s19 = sadd.s32 1, %s15
    $region7: #{tpu_custom_call.1} parent=1 // loop_footer_branch
      %14 = sbr.rel target = $region3
    $region8: #{tpu_custom_call.1} parent=1 // loop_exit
      _
    %714 = vsyncpa [#allocation4], 1
    %s715 = scalar_lea.sflag [#allocation4], 1
    %716 = vsyncpa %s715, 1
    %717 = vsyncpa [#allocation7], 1
    %718 = vsyncpa [#allocation5], 1
    %s719 = scalar_lea.sflag [#allocation5], 1
    %720 = vsyncpa %s719, 1

</llo_original>
